<compile_context>
chip_gen: v7x
topology: tpu7x:2x2x1
jax: 0.10.0
libtpu: 0.0.40
codegen_flags: <defaults>
</compile_context>

<pallas_src>
import jax
import jax.numpy as jnp
from jax.experimental import pallas as pl
from jax.experimental.pallas import tpu as pltpu


def _round_up(n, m):
    return (n + m - 1) // m * m


def _mlp_kernel(x_ref, w1_ref, b1_ref, w2_ref, b2_ref,
                w3_ref, b3_ref, w4_ref, b4_ref, o_ref):
    # One batch block per grid step; weights stay VMEM-resident (constant
    # index_map).  Four MXU matmuls with f32 accumulation; bias add + ReLU in
    # f32 on the VPU (safe on v5e, which lacks bf16 VPU arithmetic).
    cdt = w1_ref.dtype  # matmul-input compute dtype (f32 or bf16)

    h = x_ref[...]
    h = jnp.dot(h, w1_ref[...], preferred_element_type=jnp.float32) + b1_ref[...]
    h = jnp.maximum(h, 0.0).astype(cdt)

    h = jnp.dot(h, w2_ref[...], preferred_element_type=jnp.float32) + b2_ref[...]
    h = jnp.maximum(h, 0.0).astype(cdt)

    h = jnp.dot(h, w3_ref[...], preferred_element_type=jnp.float32) + b3_ref[...]
    h = jnp.maximum(h, 0.0).astype(cdt)

    h = jnp.dot(h, w4_ref[...], preferred_element_type=jnp.float32) + b4_ref[...]
    o_ref[...] = h.astype(o_ref.dtype)


def mlp_forward(x, params, *, block_m=128, compute_dtype=jnp.float32):
    """x: (B, stateLength+actionLength) f32 -> (B, stateLength) f32.

    block_m: max batch tile (MXU rows). 128 works on all chips; 256 is worth
    trying on v6e/v7x for large batches.
    compute_dtype: jnp.float32 or jnp.bfloat16 (matmul-input dtype; MXU
    accumulation and bias/ReLU stay f32).
    """
    (w1, b1), (w2, b2), (w3, b3), (w4, b4) = params

    squeeze = False
    if x.ndim == 1:
        x = x[None, :]
        squeeze = True

    batch, in_dim = x.shape
    hid = w1.shape[1]
    out_dim = w4.shape[1]

    # Adaptive batch tile (multiple of 8 sublanes), batch rows padded to a
    # multiple of the tile.  Feature dims stay natural: blocks whose last dim
    # equals the full array dim satisfy the (8,128) constraint.
    block_m = min(block_m, _round_up(max(batch, 1), 8))
    m_pad = _round_up(max(batch, 1), block_m)
    n_blocks = m_pad // block_m

    x_c = x.astype(compute_dtype)
    if m_pad != batch:
        x_c = jnp.pad(x_c, ((0, m_pad - batch), (0, 0)))

    wc = lambda w: w.astype(compute_dtype)
    bc = lambda b: jnp.reshape(b, (1, -1)).astype(jnp.float32)

    const = lambda i: (0, 0)  # parameters: same block every step -> DMA'd once
    grid_spec = pltpu.PrefetchScalarGridSpec(
        num_scalar_prefetch=0,
        grid=(n_blocks,),
        in_specs=[
            pl.BlockSpec((block_m, in_dim), lambda i: (i, 0)),   # x (streamed)
            pl.BlockSpec((in_dim, hid), const),                  # w1
            pl.BlockSpec((1, hid), const),                       # b1
            pl.BlockSpec((hid, hid), const),                     # w2
            pl.BlockSpec((1, hid), const),                       # b2
            pl.BlockSpec((hid, hid), const),                     # w3
            pl.BlockSpec((1, hid), const),                       # b3
            pl.BlockSpec((hid, out_dim), const),                 # w4
            pl.BlockSpec((1, out_dim), const),                   # b4
        ],
        out_specs=pl.BlockSpec((block_m, out_dim), lambda i: (i, 0)),
    )

    itemsize = jnp.dtype(compute_dtype).itemsize
    n_weight = in_dim * hid + 2 * hid * hid + hid * out_dim
    flops = 2 * m_pad * (in_dim * hid + 2 * hid * hid + hid * out_dim)
    bytes_accessed = (m_pad * in_dim * itemsize          # x in
                      + n_weight * itemsize              # weights in
                      + (3 * hid + out_dim) * 4          # biases in
                      + m_pad * out_dim * 4)             # out
    cost = pl.CostEstimate(flops=flops, transcendentals=0,
                           bytes_accessed=bytes_accessed)

    out_p = pl.pallas_call(
        _mlp_kernel,
        out_shape=jax.ShapeDtypeStruct((m_pad, out_dim), jnp.float32),
        grid_spec=grid_spec,
        compiler_params=pltpu.CompilerParams(
            dimension_semantics=("parallel",)),
        cost_estimate=cost,
    )(x_c, wc(w1), bc(b1), wc(w2), bc(b2), wc(w3), bc(b3), wc(w4), bc(b4))

    out = out_p[:batch] if m_pad != batch else out_p
    return out[0] if squeeze else out


def init_params(key, state_length, action_length):
    """Deterministic init mimicking PyTorch nn.Linear default U(-1/sqrt(fan_in), +)."""
    dims = [state_length + action_length, 256, 256, 256, state_length]
    params = []
    for i in range(4):
        fan_in, fan_out = dims[i], dims[i + 1]
        key, kw, kb = jax.random.split(key, 3)
        bound = 1.0 / (fan_in ** 0.5)
        # stored as (in, out) so the kernel computes x @ W (same math as
        # torch.nn.Linear(x) = x @ W.T + b with W (out, in)).
        w = jax.random.uniform(kw, (fan_in, fan_out), jnp.float32, -bound, bound)
        b = jax.random.uniform(kb, (1, fan_out), jnp.float32, -bound, bound)
        params.append((w, b))
    return params


def reference_forward(x, params):
    h = x
    for i, (w, b) in enumerate(params):
        h = h @ w + b
        if i < 3:
            h = jnp.maximum(h, 0.0)
    return h


if __name__ == "__main__":
    STATE_LEN = 12
    ACTION_LEN = 4

    key = jax.random.PRNGKey(0)
    key, kx_small, kx_big = jax.random.split(key, 3)
    params = init_params(key, STATE_LEN, ACTION_LEN)

    # Small batch: adaptive tile (block_m = 8), single grid step, f32 path.
    x_small = jax.random.normal(kx_small, (8, STATE_LEN + ACTION_LEN), jnp.float32)
    out_small = jax.block_until_ready(mlp_forward(x_small, params))
    ref_small = reference_forward(x_small, params)
    assert out_small.shape == (8, STATE_LEN)
    assert jnp.allclose(out_small, ref_small, atol=1e-4, rtol=1e-4)

    # Larger batch exercising a multi-block grid (300 -> 3 blocks of 128,
    # last block row-padded).
    x_big = jax.random.normal(kx_big, (300, STATE_LEN + ACTION_LEN), jnp.float32)
    out_big = jax.block_until_ready(mlp_forward(x_big, params))
    ref_big = reference_forward(x_big, params)
    assert out_big.shape == (300, STATE_LEN)
    assert jnp.allclose(out_big, ref_big, atol=1e-4, rtol=1e-4)

    # bf16 matmul-input path (halves weight DMA / doubles MXU rate on
    # v6e/v7x), f32 accumulation.
    out_bf16 = jax.block_until_ready(
        mlp_forward(x_big, params, compute_dtype=jnp.bfloat16))
    assert out_bf16.shape == (300, STATE_LEN)
    assert jnp.allclose(out_bf16, ref_big, atol=5e-2, rtol=5e-2)

    print("KERNEL_OK")
</pallas_src>

<mosaic_0001>
module attributes {stable_mosaic.version = 11 : i64} {
  func.func @_mlp_kernel(%arg0: i32, %arg1: memref<8x16xf32, #tpu.memory_space<vmem>>, %arg2: memref<16x256xf32, #tpu.memory_space<vmem>>, %arg3: memref<1x256xf32, #tpu.memory_space<vmem>>, %arg4: memref<256x256xf32, #tpu.memory_space<vmem>>, %arg5: memref<1x256xf32, #tpu.memory_space<vmem>>, %arg6: memref<256x256xf32, #tpu.memory_space<vmem>>, %arg7: memref<1x256xf32, #tpu.memory_space<vmem>>, %arg8: memref<256x12xf32, #tpu.memory_space<vmem>>, %arg9: memref<1x12xf32, #tpu.memory_space<vmem>>, %arg10: memref<8x12xf32, #tpu.memory_space<vmem>>) attributes {dimension_semantics = [#tpu.dimension_semantics<parallel>], iteration_bounds = array<i64: 1>, scalar_prefetch = 0 : i64, scratch_operands = 0 : i64, tpu.core_type = #tpu.core_type<tc>, window_params = [{transform_indices = @transform_0, window_bounds = array<i64: 8, 16>}, {pipeline_mode = #tpu.pipeline_mode<synchronous>, transform_indices = @transform_1, window_bounds = array<i64: 16, 256>}, {pipeline_mode = #tpu.pipeline_mode<synchronous>, transform_indices = @transform_2, window_bounds = array<i64: 1, 256>}, {pipeline_mode = #tpu.pipeline_mode<synchronous>, transform_indices = @transform_3, window_bounds = array<i64: 256, 256>}, {pipeline_mode = #tpu.pipeline_mode<synchronous>, transform_indices = @transform_4, window_bounds = array<i64: 1, 256>}, {pipeline_mode = #tpu.pipeline_mode<synchronous>, transform_indices = @transform_5, window_bounds = array<i64: 256, 256>}, {pipeline_mode = #tpu.pipeline_mode<synchronous>, transform_indices = @transform_6, window_bounds = array<i64: 1, 256>}, {pipeline_mode = #tpu.pipeline_mode<synchronous>, transform_indices = @transform_7, window_bounds = array<i64: 256, 12>}, {pipeline_mode = #tpu.pipeline_mode<synchronous>, transform_indices = @transform_8, window_bounds = array<i64: 1, 12>}, {transform_indices = @transform_9, window_bounds = array<i64: 8, 12>}]} {
    %c0 = arith.constant 0 : index
    %c0_0 = arith.constant 0 : index
    %0 = vector.load %arg1[%c0, %c0_0] : memref<8x16xf32, #tpu.memory_space<vmem>>, vector<8x16xf32>
    %c0_1 = arith.constant 0 : index
    %c0_2 = arith.constant 0 : index
    %1 = vector.load %arg2[%c0_1, %c0_2] : memref<16x256xf32, #tpu.memory_space<vmem>>, vector<16x256xf32>
    %cst = arith.constant dense<0.000000e+00> : vector<8x256xf32>
    %2 = tpu.matmul %0, %1, %cst {dimension_numbers = #tpu.dot_dimension_numbers<[1], [0], [0], [1], [0, 0, 1, 1], [], []>} : vector<8x16xf32>, vector<16x256xf32>, vector<8x256xf32> -> vector<8x256xf32>
    %c0_3 = arith.constant 0 : index
    %c0_4 = arith.constant 0 : index
    %3 = vector.load %arg3[%c0_3, %c0_4] : memref<1x256xf32, #tpu.memory_space<vmem>>, vector<1x256xf32>
    %4 = vector.broadcast %3 : vector<1x256xf32> to vector<8x256xf32>
    %5 = arith.addf %2, %4 : vector<8x256xf32>
    %cst_5 = arith.constant 0.000000e+00 : f32
    %6 = vector.broadcast %cst_5 : f32 to vector<8x256xf32>
    %7 = arith.maximumf %5, %6 : vector<8x256xf32>
    %c0_6 = arith.constant 0 : index
    %c0_7 = arith.constant 0 : index
    %8 = vector.load %arg4[%c0_6, %c0_7] : memref<256x256xf32, #tpu.memory_space<vmem>>, vector<256x256xf32>
    %cst_8 = arith.constant dense<0.000000e+00> : vector<8x256xf32>
    %9 = tpu.matmul %7, %8, %cst_8 {dimension_numbers = #tpu.dot_dimension_numbers<[1], [0], [0], [1], [0, 0, 1, 1], [], []>} : vector<8x256xf32>, vector<256x256xf32>, vector<8x256xf32> -> vector<8x256xf32>
    %c0_9 = arith.constant 0 : index
    %c0_10 = arith.constant 0 : index
    %10 = vector.load %arg5[%c0_9, %c0_10] : memref<1x256xf32, #tpu.memory_space<vmem>>, vector<1x256xf32>
    %11 = vector.broadcast %10 : vector<1x256xf32> to vector<8x256xf32>
    %12 = arith.addf %9, %11 : vector<8x256xf32>
    %cst_11 = arith.constant 0.000000e+00 : f32
    %13 = vector.broadcast %cst_11 : f32 to vector<8x256xf32>
    %14 = arith.maximumf %12, %13 : vector<8x256xf32>
    %c0_12 = arith.constant 0 : index
    %c0_13 = arith.constant 0 : index
    %15 = vector.load %arg6[%c0_12, %c0_13] : memref<256x256xf32, #tpu.memory_space<vmem>>, vector<256x256xf32>
    %cst_14 = arith.constant dense<0.000000e+00> : vector<8x256xf32>
    %16 = tpu.matmul %14, %15, %cst_14 {dimension_numbers = #tpu.dot_dimension_numbers<[1], [0], [0], [1], [0, 0, 1, 1], [], []>} : vector<8x256xf32>, vector<256x256xf32>, vector<8x256xf32> -> vector<8x256xf32>
    %c0_15 = arith.constant 0 : index
    %c0_16 = arith.constant 0 : index
    %17 = vector.load %arg7[%c0_15, %c0_16] : memref<1x256xf32, #tpu.memory_space<vmem>>, vector<1x256xf32>
    %18 = vector.broadcast %17 : vector<1x256xf32> to vector<8x256xf32>
    %19 = arith.addf %16, %18 : vector<8x256xf32>
    %cst_17 = arith.constant 0.000000e+00 : f32
    %20 = vector.broadcast %cst_17 : f32 to vector<8x256xf32>
    %21 = arith.maximumf %19, %20 : vector<8x256xf32>
    %c0_18 = arith.constant 0 : index
    %c0_19 = arith.constant 0 : index
    %22 = vector.load %arg8[%c0_18, %c0_19] : memref<256x12xf32, #tpu.memory_space<vmem>>, vector<256x12xf32>
    %cst_20 = arith.constant dense<0.000000e+00> : vector<8x12xf32>
    %23 = tpu.matmul %21, %22, %cst_20 {dimension_numbers = #tpu.dot_dimension_numbers<[1], [0], [0], [1], [0, 0, 1, 1], [], []>} : vector<8x256xf32>, vector<256x12xf32>, vector<8x12xf32> -> vector<8x12xf32>
    %c0_21 = arith.constant 0 : index
    %c0_22 = arith.constant 0 : index
    %24 = vector.load %arg9[%c0_21, %c0_22] : memref<1x12xf32, #tpu.memory_space<vmem>>, vector<1x12xf32>
    %25 = vector.broadcast %24 : vector<1x12xf32> to vector<8x12xf32>
    %26 = arith.addf %23, %25 : vector<8x12xf32>
    %c0_23 = arith.constant 0 : index
    %c0_24 = arith.constant 0 : index
    %27 = vector.load %arg10[%c0_23, %c0_24] : memref<8x12xf32, #tpu.memory_space<vmem>>, vector<8x12xf32>
    tpu.vector_store %arg10[%c0_23, %c0_24], %26 {strides = array<i32>} : memref<8x12xf32, #tpu.memory_space<vmem>>, vector<8x12xf32>,
    return
  }
  func.func @transform_0(%arg0: i32) -> (i32, i32) {
    %c0_i32 = arith.constant 0 : i32
    %c0_i32_0 = arith.constant 0 : i32
    return %arg0, %c0_i32 : i32, i32
  }
  func.func @transform_1(%arg0: i32) -> (i32, i32) {
    %c0_i32 = arith.constant 0 : i32
    %c0_i32_0 = arith.constant 0 : i32
    %c0_i32_1 = arith.constant 0 : i32
    return %c0_i32, %c0_i32_0 : i32, i32
  }
  func.func @transform_2(%arg0: i32) -> (i32, i32) {
    %c0_i32 = arith.constant 0 : i32
    %c0_i32_0 = arith.constant 0 : i32
    %c0_i32_1 = arith.constant 0 : i32
    return %c0_i32, %c0_i32_0 : i32, i32
  }
  func.func @transform_3(%arg0: i32) -> (i32, i32) {
    %c0_i32 = arith.constant 0 : i32
    %c0_i32_0 = arith.constant 0 : i32
    %c0_i32_1 = arith.constant 0 : i32
    return %c0_i32, %c0_i32_0 : i32, i32
  }
  func.func @transform_4(%arg0: i32) -> (i32, i32) {
    %c0_i32 = arith.constant 0 : i32
    %c0_i32_0 = arith.constant 0 : i32
    %c0_i32_1 = arith.constant 0 : i32
    return %c0_i32, %c0_i32_0 : i32, i32
  }
  func.func @transform_5(%arg0: i32) -> (i32, i32) {
    %c0_i32 = arith.constant 0 : i32
    %c0_i32_0 = arith.constant 0 : i32
    %c0_i32_1 = arith.constant 0 : i32
    return %c0_i32, %c0_i32_0 : i32, i32
  }
  func.func @transform_6(%arg0: i32) -> (i32, i32) {
    %c0_i32 = arith.constant 0 : i32
    %c0_i32_0 = arith.constant 0 : i32
    %c0_i32_1 = arith.constant 0 : i32
    return %c0_i32, %c0_i32_0 : i32, i32
  }
  func.func @transform_7(%arg0: i32) -> (i32, i32) {
    %c0_i32 = arith.constant 0 : i32
    %c0_i32_0 = arith.constant 0 : i32
    %c0_i32_1 = arith.constant 0 : i32
    return %c0_i32, %c0_i32_0 : i32, i32
  }
  func.func @transform_8(%arg0: i32) -> (i32, i32) {
    %c0_i32 = arith.constant 0 : i32
    %c0_i32_0 = arith.constant 0 : i32
    %c0_i32_1 = arith.constant 0 : i32
    return %c0_i32, %c0_i32_0 : i32, i32
  }
  func.func @transform_9(%arg0: i32) -> (i32, i32) {
    %c0_i32 = arith.constant 0 : i32
    %c0_i32_0 = arith.constant 0 : i32
    return %arg0, %c0_i32 : i32, i32
  }
}

</mosaic_0001>

<llo_original>
// kernel: tpu_custom_call.1
$region0: #{tpu_custom_call.1}
  #allocation0 [shape = 'u32[]', space=smem, size = 0x4, offset = 0x4, fixed_abs, tag = 'smem constant byte address 0x4 - core index']
  #allocation1 [shape = 'u32[144,128]{1,0:T(1,128)}', space=vmem, size = 0x12000, scoped, tag = 'internal scratch']
  %s0 = inlined_call_operand.vmem [shape: f32[8,16], index: 0, kind: input, shape index: {}]
  %s1 = inlined_call_operand.vmem [shape: f32[16,256], index: 1, kind: input, shape index: {}]
  %s2 = inlined_call_operand.vmem [shape: f32[1,256], index: 2, kind: input, shape index: {}]
  %s3 = inlined_call_operand.hbm [shape: f32[256,256], index: 3, kind: input, shape index: {}]
  %s4 = inlined_call_operand.vmem [shape: f32[1,256], index: 4, kind: input, shape index: {}]
  %s5 = inlined_call_operand.hbm [shape: f32[256,256], index: 5, kind: input, shape index: {}]
  %s6 = inlined_call_operand.vmem [shape: f32[1,256], index: 6, kind: input, shape index: {}]
  %s7 = inlined_call_operand.vmem [shape: f32[256,12], index: 7, kind: input, shape index: {}]
  %s8 = inlined_call_operand.vmem [shape: f32[1,12], index: 8, kind: input, shape index: {}]
  %s9 = inlined_call_operand.hbm [shape: f32[8,12], index: 9, kind: output, shape index: {}]
  %s10 = sld [smem:[#allocation0]]
  $region54: #{tpu_custom_call.1} parent=0
    _
  %s12 = ssub.s32 1, %s10
  %s13 = scalar_select 0, %s12, %s10
  $region1: #{tpu_custom_call.1} parent=0
    #allocation2 [shape = 'u8[262144]{0}', space=vmem, size = 0x40000, scoped, tag = 'input window, operand 3, single buffered']
    #allocation3 [shape = 's32[1]{0}', space=sflag, size = 0x4, scoped, tag = 'scoped memory for tpu_custom_call.1']
    #allocation4 [shape = 's32[1]{0}', space=sflag, size = 0x4, scoped, tag = 'scoped memory for tpu_custom_call.1']
    #allocation5 [shape = 'u8[262144]{0}', space=vmem, size = 0x40000, scoped, tag = 'input window, operand 5, single buffered']
    #allocation6 [shape = 's32[1]{0}', space=sflag, size = 0x4, scoped, tag = 'scoped memory for tpu_custom_call.1']
    #allocation7 [shape = 'u8[4096]{0}', space=vmem, size = 0x1000, scoped, tag = 'output window, operand 0, single buffered']
    %14 = vsyncpa [#allocation3], 0
    %15 = vsyncpa [#allocation6], 0
    %16 = vsyncpa [#allocation4], 0
    // Predicated region
    $region2: #{tpu_custom_call.1} parent=1 // pred_check
      _
    $region3: #{tpu_custom_call.1} parent=1 // pred_check_branch
      %18 = sbr.rel (0) target = $region5
    $region4: #{tpu_custom_call.1} parent=1 // pred_region
      _
    $region5: #{tpu_custom_call.1} parent=1 // pred_fallthru
      _
    // Predicated region
    $region6: #{tpu_custom_call.1} parent=1 // pred_check
      _
    $region7: #{tpu_custom_call.1} parent=1 // pred_check_branch
      %20 = sbr.rel (0) target = $region9
    $region8: #{tpu_custom_call.1} parent=1 // pred_region
      _
    $region9: #{tpu_custom_call.1} parent=1 // pred_fallthru
      _
    // Predicated region
    $region10: #{tpu_custom_call.1} parent=1 // pred_check
      _
    $region11: #{tpu_custom_call.1} parent=1 // pred_check_branch
      %22 = sbr.rel (0) target = $region13
    $region12: #{tpu_custom_call.1} parent=1 // pred_region
      _
    $region13: #{tpu_custom_call.1} parent=1 // pred_fallthru
      _
    // Predicated region
    $region14: #{tpu_custom_call.1} parent=1 // pred_check
      _
    $region15: #{tpu_custom_call.1} parent=1 // pred_check_branch
      %24 = sbr.rel (0) target = $region17
    $region16: #{tpu_custom_call.1} parent=1 // pred_region
      %s26 = ssub.s32 8192, 8192
      %27 = vsyncadd [#allocation3], %s26
      %s28 = sshll.u32 [#allocation2], 4
      %s29 = int_to_ptr.vmem [resolvable:$true] %s28
      %34 = dma.hbm_to_vmem [thread:$0]  %s3, 8192, %s29, [#allocation3], 256, 256, 16
    $region17: #{tpu_custom_call.1} parent=1 // pred_fallthru
      _
    // Predicated region
    $region18: #{tpu_custom_call.1} parent=1 // pred_check
      _
    $region19: #{tpu_custom_call.1} parent=1 // pred_check_branch
      %36 = sbr.rel (0) target = $region21
    $region20: #{tpu_custom_call.1} parent=1 // pred_region
      _
    $region21: #{tpu_custom_call.1} parent=1 // pred_fallthru
      _
    // Predicated region
    $region22: #{tpu_custom_call.1} parent=1 // pred_check
      _
    $region23: #{tpu_custom_call.1} parent=1 // pred_check_branch
      %38 = sbr.rel (0) target = $region25
    $region24: #{tpu_custom_call.1} parent=1 // pred_region
      %s40 = ssub.s32 8192, 8192
      %41 = vsyncadd [#allocation6], %s40
      %s42 = sshll.u32 [#allocation5], 4
      %s43 = int_to_ptr.vmem [resolvable:$true] %s42
      %48 = dma.hbm_to_vmem [thread:$0]  %s5, 8192, %s43, [#allocation6], 256, 256, 16
    $region25: #{tpu_custom_call.1} parent=1 // pred_fallthru
      _
    // Predicated region
    $region26: #{tpu_custom_call.1} parent=1 // pred_check
      _
    $region27: #{tpu_custom_call.1} parent=1 // pred_check_branch
      %50 = sbr.rel (0) target = $region29
    $region28: #{tpu_custom_call.1} parent=1 // pred_region
      _
    $region29: #{tpu_custom_call.1} parent=1 // pred_fallthru
      _
    // Predicated region
    $region30: #{tpu_custom_call.1} parent=1 // pred_check
      _
    $region31: #{tpu_custom_call.1} parent=1 // pred_check_branch
      %52 = sbr.rel (0) target = $region33
    $region32: #{tpu_custom_call.1} parent=1 // pred_region
      _
    $region33: #{tpu_custom_call.1} parent=1 // pred_fallthru
      _
    // Predicated region
    $region34: #{tpu_custom_call.1} parent=1 // pred_check
      _
    $region35: #{tpu_custom_call.1} parent=1 // pred_check_branch
      %54 = sbr.rel (0) target = $region37
    $region36: #{tpu_custom_call.1} parent=1 // pred_region
      _
    $region37: #{tpu_custom_call.1} parent=1 // pred_fallthru
      _
    // Predicated region
    $region38: #{tpu_custom_call.1} parent=1 // pred_check
      _
    $region39: #{tpu_custom_call.1} parent=1 // pred_check_branch
      %56 = sbr.rel (0) target = $region41
    $region40: #{tpu_custom_call.1} parent=1 // pred_region
      %57 = dma.done [#allocation3], 8192
    $region41: #{tpu_custom_call.1} parent=1 // pred_fallthru
      _
    // Predicated region
    $region42: #{tpu_custom_call.1} parent=1 // pred_check
      _
    $region43: #{tpu_custom_call.1} parent=1 // pred_check_branch
      %59 = sbr.rel (0) target = $region45
    $region44: #{tpu_custom_call.1} parent=1 // pred_region
      %60 = dma.done [#allocation6], 8192
    $region45: #{tpu_custom_call.1} parent=1 // pred_fallthru
      _
    %v61 = vld [vmem:[%s0] sm:$0xff]
    %v62 = vld [vmem:[%s1] sm:$0xff]
    %v63 = vld [vmem:[%s1 + $0x8] sm:$0xff]
    %v64 = vld [vmem:[%s1 + $0x10] sm:$0xff]
    %v65 = vld [vmem:[%s1 + $0x18] sm:$0xff]
    %v66 = vld [vmem:[%s2] sm:$0x3]
    %v68 = vlaneseq
    %v69 = vshrl.u32 %v68, 7
    %v70 = vsub.s32 0, %v69
    %v71 = vrot.slane %v66, %v70
    %v72 = vlaneseq
    %v73 = vshrl.u32 %v72, 7
    %v74 = vsub.s32 1, %v73
    %v75 = vrot.slane %v66, %v74
    %vm78 = vcmask 130048
    %v80 = vsel %vm78, %v61, 0
    %82 = vmatprep.subr.mxu0 %v63
    %83 = vmatpush1.msra.mxu0 %v62
    %84 = vmatprep.subr.mxu0 %v65
    %85 = vmatpush1.msra.mxu0 %v64
    %86 = vmatprep.subr.mxu0 0.0
    %87 = vmatpush1.msra.mxu0 0.0
    %88 = vmatprep.subr.mxu0 0.0
    %89 = vmatpush1.msra.mxu0 0.0
    %90 = vmatprep.subr.mxu0 0.0
    %91 = vmatpush1.msra.mxu0 0.0
    %92 = vmatprep.subr.mxu0 0.0
    %93 = vmatpush1.msra.mxu0 0.0
    %94 = vmatprep.subr.mxu0 0.0
    %95 = vmatpush1.msra.mxu0 0.0
    %96 = vmatprep.subr.mxu0 0.0
    %97 = vmatpush1.msra.mxu0 0.0
    %98 = vmatprep.subr.mxu0 0.0
    %99 = vmatpush1.msra.mxu0 0.0
    %100 = vmatprep.subr.mxu0 0.0
    %101 = vmatpush1.msra.mxu0 0.0
    %102 = vmatprep.subr.mxu0 0.0
    %103 = vmatpush1.msra.mxu0 0.0
    %104 = vmatprep.subr.mxu0 0.0
    %105 = vmatpush1.msra.mxu0 0.0
    %106 = vmatprep.subr.mxu0 0.0
    %107 = vmatpush1.msra.mxu0 0.0
    %108 = vmatprep.subr.mxu0 0.0
    %109 = vmatpush1.msra.mxu0 0.0
    %110 = vmatprep.subr.mxu0 0.0
    %111 = vmatpush1.msra.mxu0 0.0
    %112 = vmatprep.subr.mxu0 0.0
    %113 = vmatpush1.msra.mxu0 0.0
    %114 = vmatprep.subr.mxu0 0.0
    %115 = vmatpush1.msra.mxu0 0.0
    %116 = vmatprep.subr.mxu0 0.0
    %117 = vmatpush1.msra.mxu0 0.0
    %118 = vmatprep.subr.mxu0 0.0
    %119 = vmatpush1.msra.mxu0 0.0
    %120 = vmatprep.subr.mxu0 0.0
    %121 = vmatpush1.msra.mxu0 0.0
    %122 = vmatprep.subr.mxu0 0.0
    %123 = vmatpush1.msra.mxu0 0.0
    %124 = vmatprep.subr.mxu0 0.0
    %125 = vmatpush1.msra.mxu0 0.0
    %126 = vmatprep.subr.mxu0 0.0
    %127 = vmatpush1.msra.mxu0 0.0
    %128 = vmatprep.subr.mxu0 0.0
    %129 = vmatpush1.msra.mxu0 0.0
    %130 = vmatprep.subr.mxu0 0.0
    %131 = vmatpush1.msra.mxu0 0.0
    %132 = vmatprep.subr.mxu0 0.0
    %133 = vmatpush1.msra.mxu0 0.0
    %134 = vmatprep.subr.mxu0 0.0
    %135 = vmatpush1.msra.mxu0 0.0
    %136 = vmatprep.subr.mxu0 0.0
    %137 = vmatpush1.msra.mxu0 0.0
    %138 = vmatprep.subr.mxu0 0.0
    %139 = vmatpush1.msra.mxu0 0.0
    %140 = vmatprep.subr.mxu0 0.0
    %141 = vmatpush1.msra.mxu0 0.0
    %142 = vmatprep.subr.mxu0 0.0
    %143 = vmatpush1.msra.mxu0 0.0
    %144 = vmatprep.subr.mxu0 0.0
    %145 = vmatpush1.msra.mxu0 0.0
    %146 = vmatprep.mubr.f32.mxu0 0.0
    %147 = vmatmul.mubr.f32.gmra.mrb[0].mxu0 %v80
    %v148 = vpop.f32.mrb[0].mxu0
    %v149 = vadd.f32 %v71, %v148
    %v150 = vpop.f32.mrb[0].mxu0
    %v151 = vadd.f32 %v75, %v150
    %152 = vdwg.mxu0
    %v153 = vmax.f32 %v149, 0.0
    %v154 = vmax.f32 %v151, 0.0
    %v155 = vld [vmem:[#allocation2] sm:$0xff]
    %v156 = vld [vmem:[#allocation2 + $0x8] sm:$0xff]
    %v157 = vld [vmem:[#allocation2 + $0x10] sm:$0xff]
    %v158 = vld [vmem:[#allocation2 + $0x18] sm:$0xff]
    %v159 = vld [vmem:[#allocation2 + $0x20] sm:$0xff]
    %v160 = vld [vmem:[#allocation2 + $0x28] sm:$0xff]
    %v161 = vld [vmem:[#allocation2 + $0x30] sm:$0xff]
    %v162 = vld [vmem:[#allocation2 + $0x38] sm:$0xff]
    %v163 = vld [vmem:[#allocation2 + $0x40] sm:$0xff]
    %v164 = vld [vmem:[#allocation2 + $0x48] sm:$0xff]
    %v165 = vld [vmem:[#allocation2 + $0x50] sm:$0xff]
    %v166 = vld [vmem:[#allocation2 + $0x58] sm:$0xff]
    %v167 = vld [vmem:[#allocation2 + $0x60] sm:$0xff]
    %v168 = vld [vmem:[#allocation2 + $0x68] sm:$0xff]
    %v169 = vld [vmem:[#allocation2 + $0x70] sm:$0xff]
    %v170 = vld [vmem:[#allocation2 + $0x78] sm:$0xff]
    %v171 = vld [vmem:[#allocation2 + $0x80] sm:$0xff]
    %v172 = vld [vmem:[#allocation2 + $0x88] sm:$0xff]
    %v173 = vld [vmem:[#allocation2 + $0x90] sm:$0xff]
    %v174 = vld [vmem:[#allocation2 + $0x98] sm:$0xff]
    %v175 = vld [vmem:[#allocation2 + $0xa0] sm:$0xff]
    %v176 = vld [vmem:[#allocation2 + $0xa8] sm:$0xff]
    %v177 = vld [vmem:[#allocation2 + $0xb0] sm:$0xff]
    %v178 = vld [vmem:[#allocation2 + $0xb8] sm:$0xff]
    %v179 = vld [vmem:[#allocation2 + $0xc0] sm:$0xff]
    %v180 = vld [vmem:[#allocation2 + $0xc8] sm:$0xff]
    %v181 = vld [vmem:[#allocation2 + $0xd0] sm:$0xff]
    %v182 = vld [vmem:[#allocation2 + $0xd8] sm:$0xff]
    %v183 = vld [vmem:[#allocation2 + $0xe0] sm:$0xff]
    %v184 = vld [vmem:[#allocation2 + $0xe8] sm:$0xff]
    %v185 = vld [vmem:[#allocation2 + $0xf0] sm:$0xff]
    %v186 = vld [vmem:[#allocation2 + $0xf8] sm:$0xff]
    %v187 = vld [vmem:[#allocation2 + $0x100] sm:$0xff]
    %v188 = vld [vmem:[#allocation2 + $0x108] sm:$0xff]
    %v189 = vld [vmem:[#allocation2 + $0x110] sm:$0xff]
    %v190 = vld [vmem:[#allocation2 + $0x118] sm:$0xff]
    %v191 = vld [vmem:[#allocation2 + $0x120] sm:$0xff]
    %v192 = vld [vmem:[#allocation2 + $0x128] sm:$0xff]
    %v193 = vld [vmem:[#allocation2 + $0x130] sm:$0xff]
    %v194 = vld [vmem:[#allocation2 + $0x138] sm:$0xff]
    %v195 = vld [vmem:[#allocation2 + $0x140] sm:$0xff]
    %v196 = vld [vmem:[#allocation2 + $0x148] sm:$0xff]
    %v197 = vld [vmem:[#allocation2 + $0x150] sm:$0xff]
    %v198 = vld [vmem:[#allocation2 + $0x158] sm:$0xff]
    %v199 = vld [vmem:[#allocation2 + $0x160] sm:$0xff]
    %v200 = vld [vmem:[#allocation2 + $0x168] sm:$0xff]
    %v201 = vld [vmem:[#allocation2 + $0x170] sm:$0xff]
    %v202 = vld [vmem:[#allocation2 + $0x178] sm:$0xff]
    %v203 = vld [vmem:[#allocation2 + $0x180] sm:$0xff]
    %v204 = vld [vmem:[#allocation2 + $0x188] sm:$0xff]
    %v205 = vld [vmem:[#allocation2 + $0x190] sm:$0xff]
    %v206 = vld [vmem:[#allocation2 + $0x198] sm:$0xff]
    %v207 = vld [vmem:[#allocation2 + $0x1a0] sm:$0xff]
    %v208 = vld [vmem:[#allocation2 + $0x1a8] sm:$0xff]
    %v209 = vld [vmem:[#allocation2 + $0x1b0] sm:$0xff]
    %v210 = vld [vmem:[#allocation2 + $0x1b8] sm:$0xff]
    %v211 = vld [vmem:[#allocation2 + $0x1c0] sm:$0xff]
    %v212 = vld [vmem:[#allocation2 + $0x1c8] sm:$0xff]
    %v213 = vld [vmem:[#allocation2 + $0x1d0] sm:$0xff]
    %v214 = vld [vmem:[#allocation2 + $0x1d8] sm:$0xff]
    %v215 = vld [vmem:[#allocation2 + $0x1e0] sm:$0xff]
    %v216 = vld [vmem:[#allocation2 + $0x1e8] sm:$0xff]
    %v217 = vld [vmem:[#allocation2 + $0x1f0] sm:$0xff]
    %v218 = vld [vmem:[#allocation2 + $0x1f8] sm:$0xff]
    %v219 = vld [vmem:[%s4] sm:$0x3]
    %v221 = vlaneseq
    %v222 = vshrl.u32 %v221, 7
    %v223 = vsub.s32 0, %v222
    %v224 = vrot.slane %v219, %v223
    %v225 = vlaneseq
    %v226 = vshrl.u32 %v225, 7
    %v227 = vsub.s32 1, %v226
    %v228 = vrot.slane %v219, %v227
    %231 = vmatprep.subr.mxu0 %v156
    %232 = vmatpush1.msra.mxu0 %v155
    %233 = vmatprep.subr.mxu0 %v158
    %234 = vmatpush1.msra.mxu0 %v157
    %235 = vmatprep.subr.mxu0 %v160
    %236 = vmatpush1.msra.mxu0 %v159
    %237 = vmatprep.subr.mxu0 %v162
    %238 = vmatpush1.msra.mxu0 %v161
    %239 = vmatprep.subr.mxu0 %v164
    %240 = vmatpush1.msra.mxu0 %v163
    %241 = vmatprep.subr.mxu0 %v166
    %242 = vmatpush1.msra.mxu0 %v165
    %243 = vmatprep.subr.mxu0 %v168
    %244 = vmatpush1.msra.mxu0 %v167
    %245 = vmatprep.subr.mxu0 %v170
    %246 = vmatpush1.msra.mxu0 %v169
    %247 = vmatprep.subr.mxu0 %v172
    %248 = vmatpush1.msra.mxu0 %v171
    %249 = vmatprep.subr.mxu0 %v174
    %250 = vmatpush1.msra.mxu0 %v173
    %251 = vmatprep.subr.mxu0 %v176
    %252 = vmatpush1.msra.mxu0 %v175
    %253 = vmatprep.subr.mxu0 %v178
    %254 = vmatpush1.msra.mxu0 %v177
    %255 = vmatprep.subr.mxu0 %v180
    %256 = vmatpush1.msra.mxu0 %v179
    %257 = vmatprep.subr.mxu0 %v182
    %258 = vmatpush1.msra.mxu0 %v181
    %259 = vmatprep.subr.mxu0 %v184
    %260 = vmatpush1.msra.mxu0 %v183
    %261 = vmatprep.subr.mxu0 %v186
    %262 = vmatpush1.msra.mxu0 %v185
    %263 = vmatprep.subr.mxu0 %v188
    %264 = vmatpush1.msra.mxu0 %v187
    %265 = vmatprep.subr.mxu0 %v190
    %266 = vmatpush1.msra.mxu0 %v189
    %267 = vmatprep.subr.mxu0 %v192
    %268 = vmatpush1.msra.mxu0 %v191
    %269 = vmatprep.subr.mxu0 %v194
    %270 = vmatpush1.msra.mxu0 %v193
    %271 = vmatprep.subr.mxu0 %v196
    %272 = vmatpush1.msra.mxu0 %v195
    %273 = vmatprep.subr.mxu0 %v198
    %274 = vmatpush1.msra.mxu0 %v197
    %275 = vmatprep.subr.mxu0 %v200
    %276 = vmatpush1.msra.mxu0 %v199
    %277 = vmatprep.subr.mxu0 %v202
    %278 = vmatpush1.msra.mxu0 %v201
    %279 = vmatprep.subr.mxu0 %v204
    %280 = vmatpush1.msra.mxu0 %v203
    %281 = vmatprep.subr.mxu0 %v206
    %282 = vmatpush1.msra.mxu0 %v205
    %283 = vmatprep.subr.mxu0 %v208
    %284 = vmatpush1.msra.mxu0 %v207
    %285 = vmatprep.subr.mxu0 %v210
    %286 = vmatpush1.msra.mxu0 %v209
    %287 = vmatprep.subr.mxu0 %v212
    %288 = vmatpush1.msra.mxu0 %v211
    %289 = vmatprep.subr.mxu0 %v214
    %290 = vmatpush1.msra.mxu0 %v213
    %291 = vmatprep.subr.mxu0 %v216
    %292 = vmatpush1.msra.mxu0 %v215
    %293 = vmatprep.subr.mxu0 %v218
    %294 = vmatpush1.msra.mxu0 %v217
    %295 = vmatprep.mubr.f32.mxu0 %v154
    %296 = vmatmul.mubr.f32.gmra.mrb[0].mxu0 %v153
    %v297 = vpop.f32.mrb[0].mxu0
    %v298 = vadd.f32 %v224, %v297
    %v299 = vpop.f32.mrb[0].mxu0
    %v300 = vadd.f32 %v228, %v299
    %301 = vdwg.mxu0
    %v302 = vmax.f32 %v298, 0.0
    %v303 = vmax.f32 %v300, 0.0
    %v304 = vld [vmem:[#allocation5] sm:$0xff]
    %v305 = vld [vmem:[#allocation5 + $0x8] sm:$0xff]
    %v306 = vld [vmem:[#allocation5 + $0x10] sm:$0xff]
    %v307 = vld [vmem:[#allocation5 + $0x18] sm:$0xff]
    %v308 = vld [vmem:[#allocation5 + $0x20] sm:$0xff]
    %v309 = vld [vmem:[#allocation5 + $0x28] sm:$0xff]
    %v310 = vld [vmem:[#allocation5 + $0x30] sm:$0xff]
    %v311 = vld [vmem:[#allocation5 + $0x38] sm:$0xff]
    %v312 = vld [vmem:[#allocation5 + $0x40] sm:$0xff]
    %v313 = vld [vmem:[#allocation5 + $0x48] sm:$0xff]
    %v314 = vld [vmem:[#allocation5 + $0x50] sm:$0xff]
    %v315 = vld [vmem:[#allocation5 + $0x58] sm:$0xff]
    %v316 = vld [vmem:[#allocation5 + $0x60] sm:$0xff]
    %v317 = vld [vmem:[#allocation5 + $0x68] sm:$0xff]
    %v318 = vld [vmem:[#allocation5 + $0x70] sm:$0xff]
    %v319 = vld [vmem:[#allocation5 + $0x78] sm:$0xff]
    %v320 = vld [vmem:[#allocation5 + $0x80] sm:$0xff]
    %v321 = vld [vmem:[#allocation5 + $0x88] sm:$0xff]
    %v322 = vld [vmem:[#allocation5 + $0x90] sm:$0xff]
    %v323 = vld [vmem:[#allocation5 + $0x98] sm:$0xff]
    %v324 = vld [vmem:[#allocation5 + $0xa0] sm:$0xff]
    %v325 = vld [vmem:[#allocation5 + $0xa8] sm:$0xff]
    %v326 = vld [vmem:[#allocation5 + $0xb0] sm:$0xff]
    %v327 = vld [vmem:[#allocation5 + $0xb8] sm:$0xff]
    %v328 = vld [vmem:[#allocation5 + $0xc0] sm:$0xff]
    %v329 = vld [vmem:[#allocation5 + $0xc8] sm:$0xff]
    %v330 = vld [vmem:[#allocation5 + $0xd0] sm:$0xff]
    %v331 = vld [vmem:[#allocation5 + $0xd8] sm:$0xff]
    %v332 = vld [vmem:[#allocation5 + $0xe0] sm:$0xff]
    %v333 = vld [vmem:[#allocation5 + $0xe8] sm:$0xff]
    %v334 = vld [vmem:[#allocation5 + $0xf0] sm:$0xff]
    %v335 = vld [vmem:[#allocation5 + $0xf8] sm:$0xff]
    %v336 = vld [vmem:[#allocation5 + $0x100] sm:$0xff]
    %v337 = vld [vmem:[#allocation5 + $0x108] sm:$0xff]
    %v338 = vld [vmem:[#allocation5 + $0x110] sm:$0xff]
    %v339 = vld [vmem:[#allocation5 + $0x118] sm:$0xff]
    %v340 = vld [vmem:[#allocation5 + $0x120] sm:$0xff]
    %v341 = vld [vmem:[#allocation5 + $0x128] sm:$0xff]
    %v342 = vld [vmem:[#allocation5 + $0x130] sm:$0xff]
    %v343 = vld [vmem:[#allocation5 + $0x138] sm:$0xff]
    %v344 = vld [vmem:[#allocation5 + $0x140] sm:$0xff]
    %v345 = vld [vmem:[#allocation5 + $0x148] sm:$0xff]
    %v346 = vld [vmem:[#allocation5 + $0x150] sm:$0xff]
    %v347 = vld [vmem:[#allocation5 + $0x158] sm:$0xff]
    %v348 = vld [vmem:[#allocation5 + $0x160] sm:$0xff]
    %v349 = vld [vmem:[#allocation5 + $0x168] sm:$0xff]
    %v350 = vld [vmem:[#allocation5 + $0x170] sm:$0xff]
    %v351 = vld [vmem:[#allocation5 + $0x178] sm:$0xff]
    %v352 = vld [vmem:[#allocation5 + $0x180] sm:$0xff]
    %v353 = vld [vmem:[#allocation5 + $0x188] sm:$0xff]
    %v354 = vld [vmem:[#allocation5 + $0x190] sm:$0xff]
    %v355 = vld [vmem:[#allocation5 + $0x198] sm:$0xff]
    %v356 = vld [vmem:[#allocation5 + $0x1a0] sm:$0xff]
    %v357 = vld [vmem:[#allocation5 + $0x1a8] sm:$0xff]
    %v358 = vld [vmem:[#allocation5 + $0x1b0] sm:$0xff]
    %v359 = vld [vmem:[#allocation5 + $0x1b8] sm:$0xff]
    %v360 = vld [vmem:[#allocation5 + $0x1c0] sm:$0xff]
    %v361 = vld [vmem:[#allocation5 + $0x1c8] sm:$0xff]
    %v362 = vld [vmem:[#allocation5 + $0x1d0] sm:$0xff]
    %v363 = vld [vmem:[#allocation5 + $0x1d8] sm:$0xff]
    %v364 = vld [vmem:[#allocation5 + $0x1e0] sm:$0xff]
    %v365 = vld [vmem:[#allocation5 + $0x1e8] sm:$0xff]
    %v366 = vld [vmem:[#allocation5 + $0x1f0] sm:$0xff]
    %v367 = vld [vmem:[#allocation5 + $0x1f8] sm:$0xff]
    %v368 = vld [vmem:[%s6] sm:$0x3]
    %v370 = vlaneseq
    %v371 = vshrl.u32 %v370, 7
    %v372 = vsub.s32 0, %v371
    %v373 = vrot.slane %v368, %v372
    %v374 = vlaneseq
    %v375 = vshrl.u32 %v374, 7
    %v376 = vsub.s32 1, %v375
    %v377 = vrot.slane %v368, %v376
    %380 = vmatprep.subr.mxu0 %v305
    %381 = vmatpush1.msra.mxu0 %v304
    %382 = vmatprep.subr.mxu0 %v307
    %383 = vmatpush1.msra.mxu0 %v306
    %384 = vmatprep.subr.mxu0 %v309
    %385 = vmatpush1.msra.mxu0 %v308
    %386 = vmatprep.subr.mxu0 %v311
    %387 = vmatpush1.msra.mxu0 %v310
    %388 = vmatprep.subr.mxu0 %v313
    %389 = vmatpush1.msra.mxu0 %v312
    %390 = vmatprep.subr.mxu0 %v315
    %391 = vmatpush1.msra.mxu0 %v314
    %392 = vmatprep.subr.mxu0 %v317
    %393 = vmatpush1.msra.mxu0 %v316
    %394 = vmatprep.subr.mxu0 %v319
    %395 = vmatpush1.msra.mxu0 %v318
    %396 = vmatprep.subr.mxu0 %v321
    %397 = vmatpush1.msra.mxu0 %v320
    %398 = vmatprep.subr.mxu0 %v323
    %399 = vmatpush1.msra.mxu0 %v322
    %400 = vmatprep.subr.mxu0 %v325
    %401 = vmatpush1.msra.mxu0 %v324
    %402 = vmatprep.subr.mxu0 %v327
    %403 = vmatpush1.msra.mxu0 %v326
    %404 = vmatprep.subr.mxu0 %v329
    %405 = vmatpush1.msra.mxu0 %v328
    %406 = vmatprep.subr.mxu0 %v331
    %407 = vmatpush1.msra.mxu0 %v330
    %408 = vmatprep.subr.mxu0 %v333
    %409 = vmatpush1.msra.mxu0 %v332
    %410 = vmatprep.subr.mxu0 %v335
    %411 = vmatpush1.msra.mxu0 %v334
    %412 = vmatprep.subr.mxu0 %v337
    %413 = vmatpush1.msra.mxu0 %v336
    %414 = vmatprep.subr.mxu0 %v339
    %415 = vmatpush1.msra.mxu0 %v338
    %416 = vmatprep.subr.mxu0 %v341
    %417 = vmatpush1.msra.mxu0 %v340
    %418 = vmatprep.subr.mxu0 %v343
    %419 = vmatpush1.msra.mxu0 %v342
    %420 = vmatprep.subr.mxu0 %v345
    %421 = vmatpush1.msra.mxu0 %v344
    %422 = vmatprep.subr.mxu0 %v347
    %423 = vmatpush1.msra.mxu0 %v346
    %424 = vmatprep.subr.mxu0 %v349
    %425 = vmatpush1.msra.mxu0 %v348
    %426 = vmatprep.subr.mxu0 %v351
    %427 = vmatpush1.msra.mxu0 %v350
    %428 = vmatprep.subr.mxu0 %v353
    %429 = vmatpush1.msra.mxu0 %v352
    %430 = vmatprep.subr.mxu0 %v355
    %431 = vmatpush1.msra.mxu0 %v354
    %432 = vmatprep.subr.mxu0 %v357
    %433 = vmatpush1.msra.mxu0 %v356
    %434 = vmatprep.subr.mxu0 %v359
    %435 = vmatpush1.msra.mxu0 %v358
    %436 = vmatprep.subr.mxu0 %v361
    %437 = vmatpush1.msra.mxu0 %v360
    %438 = vmatprep.subr.mxu0 %v363
    %439 = vmatpush1.msra.mxu0 %v362
    %440 = vmatprep.subr.mxu0 %v365
    %441 = vmatpush1.msra.mxu0 %v364
    %442 = vmatprep.subr.mxu0 %v367
    %443 = vmatpush1.msra.mxu0 %v366
    %444 = vmatprep.mubr.f32.mxu0 %v303
    %445 = vmatmul.mubr.f32.gmra.mrb[0].mxu0 %v302
    %v446 = vpop.f32.mrb[0].mxu0
    %v447 = vadd.f32 %v373, %v446
    %v448 = vpop.f32.mrb[0].mxu0
    %v449 = vadd.f32 %v377, %v448
    %450 = vdwg.mxu0
    %v451 = vmax.f32 %v447, 0.0
    %v452 = vmax.f32 %v449, 0.0
    %v453 = vld [vmem:[%s7] sm:$0xff]
    %v454 = vld [vmem:[%s7 + $0x8] sm:$0xff]
    %v455 = vld [vmem:[%s7 + $0x10] sm:$0xff]
    %v456 = vld [vmem:[%s7 + $0x18] sm:$0xff]
    %v457 = vld [vmem:[%s7 + $0x20] sm:$0xff]
    %v458 = vld [vmem:[%s7 + $0x28] sm:$0xff]
    %v459 = vld [vmem:[%s7 + $0x30] sm:$0xff]
    %v460 = vld [vmem:[%s7 + $0x38] sm:$0xff]
    %v461 = vld [vmem:[%s7 + $0x40] sm:$0xff]
    %v462 = vld [vmem:[%s7 + $0x48] sm:$0xff]
    %v463 = vld [vmem:[%s7 + $0x50] sm:$0xff]
    %v464 = vld [vmem:[%s7 + $0x58] sm:$0xff]
    %v465 = vld [vmem:[%s7 + $0x60] sm:$0xff]
    %v466 = vld [vmem:[%s7 + $0x68] sm:$0xff]
    %v467 = vld [vmem:[%s7 + $0x70] sm:$0xff]
    %v468 = vld [vmem:[%s7 + $0x78] sm:$0xff]
    %v469 = vld [vmem:[%s7 + $0x80] sm:$0xff]
    %v470 = vld [vmem:[%s7 + $0x88] sm:$0xff]
    %v471 = vld [vmem:[%s7 + $0x90] sm:$0xff]
    %v472 = vld [vmem:[%s7 + $0x98] sm:$0xff]
    %v473 = vld [vmem:[%s7 + $0xa0] sm:$0xff]
    %v474 = vld [vmem:[%s7 + $0xa8] sm:$0xff]
    %v475 = vld [vmem:[%s7 + $0xb0] sm:$0xff]
    %v476 = vld [vmem:[%s7 + $0xb8] sm:$0xff]
    %v477 = vld [vmem:[%s7 + $0xc0] sm:$0xff]
    %v478 = vld [vmem:[%s7 + $0xc8] sm:$0xff]
    %v479 = vld [vmem:[%s7 + $0xd0] sm:$0xff]
    %v480 = vld [vmem:[%s7 + $0xd8] sm:$0xff]
    %v481 = vld [vmem:[%s7 + $0xe0] sm:$0xff]
    %v482 = vld [vmem:[%s7 + $0xe8] sm:$0xff]
    %v483 = vld [vmem:[%s7 + $0xf0] sm:$0xff]
    %v484 = vld [vmem:[%s7 + $0xf8] sm:$0xff]
    %v485 = vld [vmem:[%s8] sm:$0x1]
    %v487 = vlaneseq
    %v488 = vshrl.u32 %v487, 7
    %v489 = vsub.s32 0, %v488
    %v490 = vrot.slane %v485, %v489
    %492 = vmatprep.subr.mxu0 0.0
    %493 = vmatpush1.msra.mxu0 %v453
    %494 = vmatprep.subr.mxu0 0.0
    %495 = vmatpush1.msra.mxu0 %v454
    %496 = vmatprep.subr.mxu0 0.0
    %497 = vmatpush1.msra.mxu0 %v455
    %498 = vmatprep.subr.mxu0 0.0
    %499 = vmatpush1.msra.mxu0 %v456
    %500 = vmatprep.subr.mxu0 0.0
    %501 = vmatpush1.msra.mxu0 %v457
    %502 = vmatprep.subr.mxu0 0.0
    %503 = vmatpush1.msra.mxu0 %v458
    %504 = vmatprep.subr.mxu0 0.0
    %505 = vmatpush1.msra.mxu0 %v459
    %506 = vmatprep.subr.mxu0 0.0
    %507 = vmatpush1.msra.mxu0 %v460
    %508 = vmatprep.subr.mxu0 0.0
    %509 = vmatpush1.msra.mxu0 %v461
    %510 = vmatprep.subr.mxu0 0.0
    %511 = vmatpush1.msra.mxu0 %v462
    %512 = vmatprep.subr.mxu0 0.0
    %513 = vmatpush1.msra.mxu0 %v463
    %514 = vmatprep.subr.mxu0 0.0
    %515 = vmatpush1.msra.mxu0 %v464
    %516 = vmatprep.subr.mxu0 0.0
    %517 = vmatpush1.msra.mxu0 %v465
    %518 = vmatprep.subr.mxu0 0.0
    %519 = vmatpush1.msra.mxu0 %v466
    %520 = vmatprep.subr.mxu0 0.0
    %521 = vmatpush1.msra.mxu0 %v467
    %522 = vmatprep.subr.mxu0 0.0
    %523 = vmatpush1.msra.mxu0 %v468
    %524 = vmatprep.subr.mxu0 0.0
    %525 = vmatpush1.msra.mxu0 %v469
    %526 = vmatprep.subr.mxu0 0.0
    %527 = vmatpush1.msra.mxu0 %v470
    %528 = vmatprep.subr.mxu0 0.0
    %529 = vmatpush1.msra.mxu0 %v471
    %530 = vmatprep.subr.mxu0 0.0
    %531 = vmatpush1.msra.mxu0 %v472
    %532 = vmatprep.subr.mxu0 0.0
    %533 = vmatpush1.msra.mxu0 %v473
    %534 = vmatprep.subr.mxu0 0.0
    %535 = vmatpush1.msra.mxu0 %v474
    %536 = vmatprep.subr.mxu0 0.0
    %537 = vmatpush1.msra.mxu0 %v475
    %538 = vmatprep.subr.mxu0 0.0
    %539 = vmatpush1.msra.mxu0 %v476
    %540 = vmatprep.subr.mxu0 0.0
    %541 = vmatpush1.msra.mxu0 %v477
    %542 = vmatprep.subr.mxu0 0.0
    %543 = vmatpush1.msra.mxu0 %v478
    %544 = vmatprep.subr.mxu0 0.0
    %545 = vmatpush1.msra.mxu0 %v479
    %546 = vmatprep.subr.mxu0 0.0
    %547 = vmatpush1.msra.mxu0 %v480
    %548 = vmatprep.subr.mxu0 0.0
    %549 = vmatpush1.msra.mxu0 %v481
    %550 = vmatprep.subr.mxu0 0.0
    %551 = vmatpush1.msra.mxu0 %v482
    %552 = vmatprep.subr.mxu0 0.0
    %553 = vmatpush1.msra.mxu0 %v483
    %554 = vmatprep.subr.mxu0 0.0
    %555 = vmatpush1.msra.mxu0 %v484
    %556 = vmatprep.mubr.f32.mxu0 %v452
    %557 = vmatmul.mubr.f32.gmra.mrb[0].mxu0 %v451
    %v558 = vpop.f32.mrb[0].mxu0
    %v559 = vadd.f32 %v490, %v558
    %v560 = vpop.f32.mrb[0].mxu0
    %561 = vdwg.mxu0
    %vm562 = vcmask 97280
    %563 = vst.msk [vmem:[#allocation7] sm:$0xff] %vm562, %v559
    // Predicated region
    $region46: #{tpu_custom_call.1} parent=1 // pred_check
      _
    $region47: #{tpu_custom_call.1} parent=1 // pred_check_branch
      %565 = sbr.rel (0) target = $region49
    $region48: #{tpu_custom_call.1} parent=1 // pred_region
      %s567 = ssub.s32 128, 128
      %568 = vsyncadd [#allocation4], %s567
      %s570 = sshll.u32 [#allocation7], 4
      %s571 = int_to_ptr.vmem [resolvable:$true] %s570
      %573 = dma.vmem_to_hbm [thread:$0]  %s571, 128, %s9, [#allocation4]
    $region49: #{tpu_custom_call.1} parent=1 // pred_fallthru
      _
    // Predicated region
    $region50: #{tpu_custom_call.1} parent=1 // pred_check
      _
    $region51: #{tpu_custom_call.1} parent=1 // pred_check_branch
      %575 = sbr.rel (0) target = $region53
    $region52: #{tpu_custom_call.1} parent=1 // pred_region
      %576 = dma.done [#allocation4], 128
    $region53: #{tpu_custom_call.1} parent=1 // pred_fallthru
      _
    %577 = vsyncpa [#allocation3], 1
    %578 = vsyncpa [#allocation6], 1
    %579 = vsyncpa [#allocation4], 1

</llo_original>
